<compile_context>
chip_gen: v5e
topology: v5e:2x2
jax: 0.10.0
libtpu: 0.0.40
codegen_flags: <defaults>
</compile_context>

<pallas_src>
import functools

import jax
import jax.numpy as jnp
from jax import lax
from jax.experimental import pallas as pl
from jax.experimental.pallas import tpu as pltpu


# ---------------------------------------------------------------------------
# Kernels — output block is the (f32) accumulator, resident across the K axis.
# ---------------------------------------------------------------------------
def _linear_kernel_bias(x_ref, w_ref, b_ref, o_ref):
    # x_ref: (tm, tk)  w_ref: (tn, tk)  b_ref: (1, tn)  o_ref: (tm, tn) f32
    k = pl.program_id(2)

    @pl.when(k == 0)
    def _():
        # Bias folded into the accumulator init: added exactly once per tile.
        o_ref[...] = jnp.broadcast_to(
            b_ref[...].astype(jnp.float32), o_ref.shape
        )

    # x @ W^T by contracting the last axes of both operands — the weight is
    # never transposed in HBM.
    o_ref[...] += lax.dot_general(
        x_ref[...],
        w_ref[...],
        dimension_numbers=(((1,), (1,)), ((), ())),
        preferred_element_type=jnp.float32,
    )


def _linear_kernel_nobias(x_ref, w_ref, o_ref):
    k = pl.program_id(2)

    @pl.when(k == 0)
    def _():
        o_ref[...] = jnp.zeros_like(o_ref)

    o_ref[...] += lax.dot_general(
        x_ref[...],
        w_ref[...],
        dimension_numbers=(((1,), (1,)), ((), ())),
        preferred_element_type=jnp.float32,
    )


# ---------------------------------------------------------------------------
# Tile selection
# ---------------------------------------------------------------------------
_M_CANDIDATES = (512, 448, 384, 320, 256, 192, 128, 96, 64, 32, 16, 8)
_LANE_CANDIDATES = (2048, 1792, 1536, 1280, 1024, 896, 768, 640, 512, 384,
                    256, 128)


def _choose_tile(dim, cap, candidates):
    """Return (tile, padded_dim).

    If `dim` fits under `cap`, use the full (unpadded) extent as a single
    tile: a block dim equal to the full array dim needs no (8,128) alignment
    and avoids any HBM padding copy.  Otherwise pick the candidate tile that
    minimizes padding waste (ties -> larger tile)."""
    if dim <= cap:
        return dim, dim
    best_key, best_tile, best_pad = None, None, None
    for t in candidates:
        if t > cap:
            continue
        pad = -(-dim // t) * t
        key = (pad, -t)
        if best_key is None or key < best_key:
            best_key, best_tile, best_pad = key, t, pad
    return best_tile, best_pad


# ---------------------------------------------------------------------------
# Wrapper
# ---------------------------------------------------------------------------
@functools.partial(jax.jit, static_argnames=("compute_dtype",))
def _linear_forward_impl(x, weight, bias, compute_dtype):
    batch, in_features = x.shape
    out_features = weight.shape[0]
    has_bias = bias is not None

    # Prefer a single M tile (weights stream from HBM exactly once); only
    # shrink when the batch genuinely exceeds the cap.
    tm, m_pad = _choose_tile(batch, 512, _M_CANDIDATES)
    tn, n_pad = _choose_tile(out_features, 1024, _LANE_CANDIDATES)
    tk, k_pad = _choose_tile(in_features, 2048, _LANE_CANDIDATES)

    # v7x megacore: if there is only one (M, N) tile, split N so both
    # TensorCores get work (keeps 128-lane alignment; no-op for small N).
    if m_pad // tm == 1 and n_pad // tn == 1 and tn >= 256 and tn % 256 == 0:
        tn //= 2

    in_bytes = jnp.dtype(compute_dtype).itemsize

    # Cast (bf16 MXU feed) then pad; all-zero pads are elided by XLA and
    # zero K-padding is accumulation-safe.  Padded M/N is sliced off at the
    # end.
    x_p = x.astype(compute_dtype)
    if m_pad != batch or k_pad != in_features:
        x_p = jnp.pad(x_p, ((0, m_pad - batch), (0, k_pad - in_features)))
    w_p = weight.astype(compute_dtype)
    if n_pad != out_features or k_pad != in_features:
        w_p = jnp.pad(
            w_p, ((0, n_pad - out_features), (0, k_pad - in_features))
        )

    grid_m, grid_n, grid_k = m_pad // tm, n_pad // tn, k_pad // tk
    grid = (grid_m, grid_n, grid_k)
    out_shape = jax.ShapeDtypeStruct((m_pad, n_pad), jnp.float32)

    # Honest traffic estimate: x re-read once per N tile, W once per M tile.
    bytes_accessed = (
        m_pad * k_pad * in_bytes * grid_n
        + n_pad * k_pad * in_bytes * grid_m
        + m_pad * n_pad * 4
        + (n_pad * 4 if has_bias else 0)
    )
    cost = pl.CostEstimate(
        flops=2 * m_pad * n_pad * k_pad,
        bytes_accessed=int(bytes_accessed),
        transcendentals=0,
    )

    # VMEM working set: double-buffered x/W/out tiles (+ bias).  Clamp the
    # scoped limit to <=48 MiB so the same config stays safe on v7x (64 MiB
    # physical) while still lifting v5e's 16 MiB default.
    vmem_need = (
        2 * (tm * tk * in_bytes + tn * tk * in_bytes)
        + 2 * (tm * tn * 4)
        + 2 * (tn * 4)
    )
    vmem_limit = int(min(max(vmem_need + (8 << 20), 32 << 20), 48 << 20))

    cparams = pltpu.CompilerParams(
        dimension_semantics=("parallel", "parallel", "arbitrary"),
        vmem_limit_bytes=vmem_limit,
    )

    x_spec = pl.BlockSpec((tm, tk), lambda i, j, k: (i, k))
    w_spec = pl.BlockSpec((tn, tk), lambda i, j, k: (j, k))  # W is [OUT, IN]
    o_spec = pl.BlockSpec((tm, tn), lambda i, j, k: (i, j))

    if has_bias:
        b_p = bias.astype(jnp.float32)
        if n_pad != out_features:
            b_p = jnp.pad(b_p, (0, n_pad - out_features))
        b_p = b_p.reshape(1, n_pad)
        b_spec = pl.BlockSpec((1, tn), lambda i, j, k: (0, j))
        out_p = pl.pallas_call(
            _linear_kernel_bias,
            out_shape=out_shape,
            grid_spec=pltpu.PrefetchScalarGridSpec(
                num_scalar_prefetch=0,
                grid=grid,
                in_specs=[x_spec, w_spec, b_spec],
                out_specs=o_spec,
            ),
            compiler_params=cparams,
            cost_estimate=cost,
        )(x_p, w_p, b_p)
    else:
        out_p = pl.pallas_call(
            _linear_kernel_nobias,
            out_shape=out_shape,
            grid_spec=pltpu.PrefetchScalarGridSpec(
                num_scalar_prefetch=0,
                grid=grid,
                in_specs=[x_spec, w_spec],
                out_specs=o_spec,
            ),
            compiler_params=cparams,
            cost_estimate=cost,
        )(x_p, w_p)

    return out_p[:batch, :out_features]


def linear_forward(x, weight, bias=None, compute_dtype=jnp.bfloat16):
    """Pallas equivalent of Linear.forward.

    x:      (batch, in_features)  float32
    weight: (out_features, in_features) float32   (PyTorch convention)
    bias:   (out_features,) float32 or None
    compute_dtype: MXU feed dtype (bf16 by default; f32 for exact results).
    """
    return _linear_forward_impl(x, weight, bias, compute_dtype)


def init_linear_params(key, in_features, out_features, bias=True):
    """Parameter init mirroring the PyTorch module:
    uniform(-1/sqrt(in), 1/sqrt(in)) for both weight and bias."""
    kw, kb = jax.random.split(key)
    bound = 1.0 / jnp.sqrt(jnp.float32(in_features))
    weight = jax.random.uniform(
        kw, (out_features, in_features), dtype=jnp.float32,
        minval=-bound, maxval=bound)
    b = None
    if bias:
        b = jax.random.uniform(
            kb, (out_features,), dtype=jnp.float32,
            minval=-bound, maxval=bound)
    return weight, b


if __name__ == "__main__":
    key = jax.random.PRNGKey(0)
    k_x, k_p = jax.random.split(key)

    batch, in_features, out_features = 8, 32, 64
    x = jax.random.normal(k_x, (batch, in_features), dtype=jnp.float32)
    weight, bias = init_linear_params(k_p, in_features, out_features, bias=True)

    ref = x @ weight.T + bias

    # Default path: bf16 MXU feed, f32 accumulation (loosened tolerance).
    out = jax.block_until_ready(linear_forward(x, weight, bias))
    assert out.shape == (batch, out_features)
    assert out.dtype == jnp.float32
    assert jnp.allclose(out, ref, atol=2e-2, rtol=2e-2)

    # Exact path: f32 compute dtype matches the reference tightly.
    out_f32 = jax.block_until_ready(
        linear_forward(x, weight, bias, compute_dtype=jnp.float32))
    assert jnp.allclose(out_f32, ref, atol=1e-5, rtol=1e-5)

    # Without bias.
    out_nb = jax.block_until_ready(linear_forward(x, weight, None))
    assert jnp.allclose(out_nb, x @ weight.T, atol=2e-2, rtol=2e-2)

    print("KERNEL_OK")
</pallas_src>

<mosaic_0001>
module attributes {stable_mosaic.version = 11 : i64} {
  func.func @_linear_kernel_bias(%arg0: i32, %arg1: i32, %arg2: i32, %arg3: memref<8x32xbf16, #tpu.memory_space<vmem>>, %arg4: memref<64x32xbf16, #tpu.memory_space<vmem>>, %arg5: memref<1x64xf32, #tpu.memory_space<vmem>>, %arg6: memref<8x64xf32, #tpu.memory_space<vmem>>) attributes {dimension_semantics = [#tpu.dimension_semantics<parallel>, #tpu.dimension_semantics<parallel>, #tpu.dimension_semantics<arbitrary>], iteration_bounds = array<i64: 1, 1, 1>, scalar_prefetch = 0 : i64, scratch_operands = 0 : i64, tpu.core_type = #tpu.core_type<tc>, window_params = [{transform_indices = @transform_0, window_bounds = array<i64: 8, 32>}, {transform_indices = @transform_1, window_bounds = array<i64: 64, 32>}, {transform_indices = @transform_2, window_bounds = array<i64: 1, 64>}, {transform_indices = @transform_3, window_bounds = array<i64: 8, 64>}]} {
    %c0_i32 = arith.constant 0 : i32
    %0 = arith.cmpi eq, %arg2, %c0_i32 : i32
    %1 = arith.extui %0 : i1 to i32
    %c0_i32_0 = arith.constant 0 : i32
    %2 = arith.cmpi ne, %1, %c0_i32_0 : i32
    scf.if %2 {
      %c0_8 = arith.constant 0 : index
      %c0_9 = arith.constant 0 : index
      %9 = vector.load %arg5[%c0_8, %c0_9] : memref<1x64xf32, #tpu.memory_space<vmem>>, vector<1x64xf32>
      %10 = vector.shape_cast %9 : vector<1x64xf32> to vector<1x64xf32>
      %11 = vector.broadcast %10 : vector<1x64xf32> to vector<8x64xf32>
      %c0_10 = arith.constant 0 : index
      %c0_11 = arith.constant 0 : index
      %12 = vector.load %arg6[%c0_10, %c0_11] : memref<8x64xf32, #tpu.memory_space<vmem>>, vector<8x64xf32>
      tpu.vector_store %arg6[%c0_10, %c0_11], %11 {strides = array<i32>} : memref<8x64xf32, #tpu.memory_space<vmem>>, vector<8x64xf32>,
    } else {
    }
    %c0 = arith.constant 0 : index
    %c0_1 = arith.constant 0 : index
    %3 = vector.load %arg6[%c0, %c0_1] : memref<8x64xf32, #tpu.memory_space<vmem>>, vector<8x64xf32>
    %c0_2 = arith.constant 0 : index
    %c0_3 = arith.constant 0 : index
    %4 = vector.load %arg3[%c0_2, %c0_3] : memref<8x32xbf16, #tpu.memory_space<vmem>>, vector<8x32xbf16>
    %c0_4 = arith.constant 0 : index
    %c0_5 = arith.constant 0 : index
    %5 = vector.load %arg4[%c0_4, %c0_5] : memref<64x32xbf16, #tpu.memory_space<vmem>>, vector<64x32xbf16>
    %cst = arith.constant dense<0.000000e+00> : vector<8x64xf32>
    %6 = tpu.matmul %4, %5, %cst {dimension_numbers = #tpu.dot_dimension_numbers<[1], [1], [0], [0], [0, 0, 1, 0], [], []>} : vector<8x32xbf16>, vector<64x32xbf16>, vector<8x64xf32> -> vector<8x64xf32>
    %7 = arith.addf %3, %6 : vector<8x64xf32>
    %c0_6 = arith.constant 0 : index
    %c0_7 = arith.constant 0 : index
    %8 = vector.load %arg6[%c0_6, %c0_7] : memref<8x64xf32, #tpu.memory_space<vmem>>, vector<8x64xf32>
    tpu.vector_store %arg6[%c0_6, %c0_7], %7 {strides = array<i32>} : memref<8x64xf32, #tpu.memory_space<vmem>>, vector<8x64xf32>,
    return
  }
  func.func @transform_0(%arg0: i32, %arg1: i32, %arg2: i32) -> (i32, i32) {
    %c0_i32 = arith.constant 0 : i32
    return %arg0, %arg2 : i32, i32
  }
  func.func @transform_1(%arg0: i32, %arg1: i32, %arg2: i32) -> (i32, i32) {
    %c0_i32 = arith.constant 0 : i32
    return %arg1, %arg2 : i32, i32
  }
  func.func @transform_2(%arg0: i32, %arg1: i32, %arg2: i32) -> (i32, i32) {
    %c0_i32 = arith.constant 0 : i32
    %c0_i32_0 = arith.constant 0 : i32
    return %c0_i32, %arg1 : i32, i32
  }
  func.func @transform_3(%arg0: i32, %arg1: i32, %arg2: i32) -> (i32, i32) {
    %c0_i32 = arith.constant 0 : i32
    return %arg0, %arg1 : i32, i32
  }
}

</mosaic_0001>

<llo_original>
// kernel: _linear_forward_impl.1
$region0: #{_linear_forward_impl.1}
  #allocation0 [shape = 'u32[]', space=smem, size = 0x4, offset = 0x4, fixed_abs, tag = 'smem constant byte address 0x4 - core index']
  #allocation1 [shape = 'u32[72,128]{1,0:T(1,128)}', space=vmem, size = 0x9000, scoped, tag = 'internal scratch']
  %s0 = inlined_call_operand.vmem [shape: bf16[8,32], index: 0, kind: input, shape index: {}]
  %s1 = inlined_call_operand.vmem [shape: bf16[64,32], index: 1, kind: input, shape index: {}]
  %s2 = inlined_call_operand.vmem [shape: f32[1,64], index: 2, kind: input, shape index: {}]
  %s3 = inlined_call_operand.hbm [shape: f32[8,64], index: 3, kind: output, shape index: {}]
  %s4 = sld [smem:[#allocation0]]
  $region26: #{_linear_forward_impl.1} parent=0
    _
  %s6 = ssub.s32 1, %s4
  %s7 = scalar_select 0, %s6, %s4
  $region1: #{_linear_forward_impl.1} parent=0
    #allocation2 [shape = 'u8[4096]{0}', space=vmem, size = 0x1000, scoped, tag = 'output window, operand 0, single buffered']
    #allocation3 [shape = 's32[1]{0}', space=sflag, size = 0x4, scoped, tag = 'scoped memory for _linear_forward_impl.1']
    %8 = vsyncpa [#allocation3], 0
    // Predicated region
    $region2: #{_linear_forward_impl.1} parent=1 // pred_check
      _
    $region3: #{_linear_forward_impl.1} parent=1 // pred_check_branch
      %10 = sbr.rel (0) target = $region5
    $region4: #{_linear_forward_impl.1} parent=1 // pred_region
      _
    $region5: #{_linear_forward_impl.1} parent=1 // pred_fallthru
      _
    // Predicated region
    $region6: #{_linear_forward_impl.1} parent=1 // pred_check
      _
    $region7: #{_linear_forward_impl.1} parent=1 // pred_check_branch
      %12 = sbr.rel (0) target = $region9
    $region8: #{_linear_forward_impl.1} parent=1 // pred_region
      _
    $region9: #{_linear_forward_impl.1} parent=1 // pred_fallthru
      _
    // Predicated region
    $region10: #{_linear_forward_impl.1} parent=1 // pred_check
      _
    $region11: #{_linear_forward_impl.1} parent=1 // pred_check_branch
      %14 = sbr.rel (0) target = $region13
    $region12: #{_linear_forward_impl.1} parent=1 // pred_region
      _
    $region13: #{_linear_forward_impl.1} parent=1 // pred_fallthru
      _
    %p16 = scmp.eq.s32.totalorder 0, 0
    // Predicated region
    $region14: #{_linear_forward_impl.1} parent=1 // pred_check
      %p17 = pneg %p16
    $region15: #{_linear_forward_impl.1} parent=1 // pred_check_branch
      %19 = sbr.rel (%p17) target = $region17
    $region16: #{_linear_forward_impl.1} parent=1 // pred_region
      %v20 = vld [vmem:[%s2] sm:$0x1]
      %v22 = vperm.slane %v20, 0
      %vm24 = vcmask 523264
      %25 = vst.msk [vmem:[#allocation2] sm:$0xff] %vm24, %v22
    $region17: #{_linear_forward_impl.1} parent=1 // pred_fallthru
      _
    %v26 = vld [vmem:[#allocation2] sm:$0xff]
    %v27 = vld [vmem:[%s0] sm:$0xf]
    %v28 = vld [vmem:[%s1] sm:$0xf]
    %v29 = vld [vmem:[%s1 + $0x4] sm:$0xf]
    %v30 = vld [vmem:[%s1 + $0x8] sm:$0xf]
    %v31 = vld [vmem:[%s1 + $0xc] sm:$0xf]
    %v32 = vld [vmem:[%s1 + $0x10] sm:$0xf]
    %v33 = vld [vmem:[%s1 + $0x14] sm:$0xf]
    %v34 = vld [vmem:[%s1 + $0x18] sm:$0xf]
    %v35 = vld [vmem:[%s1 + $0x1c] sm:$0xf]
    %v44 = vunpack.c.l.b16 %v28
    %v45 = vunpack.c.l.b16 %v29
    %v46 = vunpack.c.l.b16 %v30
    %v47 = vunpack.c.l.b16 %v31
    %v48 = vunpack.c.l.b16 %v32
    %v49 = vunpack.c.l.b16 %v33
    %v50 = vunpack.c.l.b16 %v34
    %v51 = vunpack.c.l.b16 %v35
    %v52 = vpack.c.b16 %v45, %v44
    %v53 = vpack.c.b16 %v47, %v46
    %v54 = vpack.c.b16 %v49, %v48
    %v55 = vpack.c.b16 %v51, %v50
    %vm56 = vcmask 261120
    %v58 = vsel %vm56, %v27, 0
    %v61 = vsel %vm56, %v52, 0
    %v64 = vsel %vm56, %v53, 0
    %v67 = vsel %vm56, %v54, 0
    %v70 = vsel %vm56, %v55, 0
    %72 = vmatpush.bf16.xpose.msra.mxu0 0
    %73 = vmatpush.bf16.xpose.msra.mxu0 0
    %74 = vmatpush.bf16.xpose.msra.mxu0 0
    %75 = vmatpush.bf16.xpose.msra.mxu0 0
    %76 = vmatpush.bf16.xpose.msra.mxu0 %v70
    %77 = vmatpush.bf16.xpose.msra.mxu0 %v67
    %78 = vmatpush.bf16.xpose.msra.mxu0 %v64
    %79 = vmatpush.bf16.xpose.msra.mxu0 %v61
    %80 = vmatmul.bf16.gmra.mxu0 %v58
    %v81 = vpop.f32.mrf.mxu0
    %v82 = vadd.f32 0.0, %v81
    %v83 = vpop.f32.mrf.mxu0
    %84 = vdwg.mxu0
    %v85 = vadd.f32 %v26, %v82
    %vm86 = vcmask 523264
    %87 = vst.msk [vmem:[#allocation2] sm:$0xff] %vm86, %v85
    // Predicated region
    $region18: #{_linear_forward_impl.1} parent=1 // pred_check
      _
    $region19: #{_linear_forward_impl.1} parent=1 // pred_check_branch
      %89 = sbr.rel (0) target = $region21
    $region20: #{_linear_forward_impl.1} parent=1 // pred_region
      %91 = vsyncadd [#allocation3], 0
      %s93 = sshll.u32 [#allocation2], 4
      %s94 = int_to_ptr.vmem [resolvable:$true] %s93
      %s95 = sshll.u32 %s3, 4
      %s96 = int_to_ptr.hbm [resolvable:$true] %s95
      %98 = dma.vmem_to_hbm [thread:$0]  %s94, 128, %s96, [#allocation3]
    $region21: #{_linear_forward_impl.1} parent=1 // pred_fallthru
      _
    // Predicated region
    $region22: #{_linear_forward_impl.1} parent=1 // pred_check
      _
    $region23: #{_linear_forward_impl.1} parent=1 // pred_check_branch
      %100 = sbr.rel (0) target = $region25
    $region24: #{_linear_forward_impl.1} parent=1 // pred_region
      %102 = dma.done [#allocation3], 128
    $region25: #{_linear_forward_impl.1} parent=1 // pred_fallthru
      _
    %103 = vsyncpa [#allocation3], 1

</llo_original>
